<compile_context>
chip_gen: v7x
topology: tpu7x:2x2x1
jax: 0.10.0
libtpu: 0.0.40
codegen_flags: <defaults>
</compile_context>

<pallas_src>
import functools

import jax
import jax.numpy as jnp
from jax.experimental import pallas as pl
from jax.experimental.pallas import tpu as pltpu


def channel_gate_kernel(x_ref, w1t_ref, b1t_ref, w2t_ref, b2t_ref, o_ref, *,
                        hw_true):
    x_nat = x_ref[...]                                   # (Bt, C, HWp), native dtype
    bt, c, hwp = x_nat.shape

    # --- pooling along the lane axis (keepdims => channel stays on sublane) ---
    sum_f32 = jnp.sum(x_nat.astype(jnp.float32), axis=-1, keepdims=True)
    avg = sum_f32 * (1.0 / hw_true)                      # (Bt, C, 1)

    if hwp != hw_true:                                   # static branch (trace time)
        lane = jax.lax.broadcasted_iota(jnp.int32, x_nat.shape, 2)
        neg = jnp.array(-jnp.inf, dtype=x_nat.dtype)
        x_for_max = jnp.where(lane < hw_true, x_nat, neg)
    else:
        x_for_max = x_nat
    mx = jnp.max(x_for_max, axis=-1, keepdims=True).astype(jnp.float32)  # (Bt, C, 1)

    pools = jnp.concatenate([avg, mx], axis=-1)          # (Bt, C, 2)

    # --- shared MLP in transposed (channel-on-sublane) orientation ---
    w1t = w1t_ref[...].astype(jnp.float32)               # (Ch, C)
    b1t = b1t_ref[...].astype(jnp.float32)               # (Ch, 1)
    w2t = w2t_ref[...].astype(jnp.float32)               # (C, Ch)
    b2t = b2t_ref[...].astype(jnp.float32)               # (C, 1)
    ch = w1t.shape[0]

    w1b = jnp.broadcast_to(w1t[None], (bt, ch, c))       # tiny broadcast
    h = jax.lax.dot_general(w1b, pools,
                            dimension_numbers=(((2,), (1,)), ((0,), (0,))),
                            preferred_element_type=jnp.float32)   # (Bt, Ch, 2)
    h = jnp.maximum(h + b1t[None], 0.0)

    w2b = jnp.broadcast_to(w2t[None], (bt, c, ch))
    att = jax.lax.dot_general(w2b, h,
                              dimension_numbers=(((2,), (1,)), ((0,), (0,))),
                              preferred_element_type=jnp.float32)  # (Bt, C, 2)
    att = att + b2t[None]
    att = jnp.sum(att, axis=-1, keepdims=True)           # mlp(avg) + mlp(max): (Bt, C, 1)

    # sigmoid via EUP: 1 / (1 + exp(-att))
    scale = pl.reciprocal(1.0 + jnp.exp(-att), approx=True)       # (Bt, C, 1), f32

    # --- scale the block; broadcast over the lane (spatial) axis, store in native dtype ---
    o_ref[...] = (x_nat * scale.astype(x_nat.dtype)).astype(o_ref.dtype)


def _largest_divisor_at_most(n, cap):
    cap = max(1, min(cap, n))
    for d in range(cap, 0, -1):
        if n % d == 0:
            return d
    return 1


@jax.jit
def channel_gate(x, w1, b1, w2, b2):
    """x: (B, C, H, W) NCHW. w1: (C, Ch), b1: (Ch,), w2: (Ch, C), b2: (C,)."""
    B, C, H, W = x.shape
    Ch = w1.shape[1]
    HW = H * W
    HWp = ((HW + 127) // 128) * 128                      # lane-dense last dim

    x_flat = x.reshape(B, C, HW)
    if HWp != HW:
        x_flat = jnp.pad(x_flat, ((0, 0), (0, 0), (0, HWp - HW)))

    # Choose Bt: ~2 MiB blocks (fits 4x double-buffered in every generation's
    # scoped VMEM budget), but keep at least 2 grid steps for megacore.
    per_batch_bytes = C * HWp * x.dtype.itemsize
    target_block_bytes = 2 << 20
    cap = max(1, target_block_bytes // per_batch_bytes)
    if B >= 2:
        cap = min(cap, B // 2)
    Bt = _largest_divisor_at_most(B, cap)
    grid = (B // Bt,)

    # Pre-transpose parameters at trace time (free) so the kernel never relayouts.
    w1t = jnp.asarray(w1).T.reshape(Ch, C)               # (Ch, C)
    b1t = jnp.asarray(b1).reshape(Ch, 1)                 # (Ch, 1)
    w2t = jnp.asarray(w2).T.reshape(C, Ch)               # (C, Ch)
    b2t = jnp.asarray(b2).reshape(C, 1)                  # (C, 1)

    kernel = functools.partial(channel_gate_kernel, hw_true=HW)

    out_flat = pl.pallas_call(
        kernel,
        out_shape=jax.ShapeDtypeStruct((B, C, HWp), x.dtype),
        grid_spec=pltpu.PrefetchScalarGridSpec(
            num_scalar_prefetch=0,
            grid=grid,
            in_specs=[
                pl.BlockSpec((Bt, C, HWp), lambda i: (i, 0, 0)),
                pl.BlockSpec((Ch, C), lambda i: (0, 0)),
                pl.BlockSpec((Ch, 1), lambda i: (0, 0)),
                pl.BlockSpec((C, Ch), lambda i: (0, 0)),
                pl.BlockSpec((C, 1), lambda i: (0, 0)),
            ],
            out_specs=pl.BlockSpec((Bt, C, HWp), lambda i: (i, 0, 0)),
        ),
        compiler_params=pltpu.CompilerParams(
            dimension_semantics=("parallel",),
            vmem_limit_bytes=32 * 1024 * 1024,
        ),
    )(x_flat, w1t, b1t, w2t, b2t)

    return out_flat[:, :, :HW].reshape(B, C, H, W)


def channel_gate_ref(x, w1, b1, w2, b2):
    """Pure-JAX reference mirroring the PyTorch forward (avg + max pools)."""
    B, C, H, W = x.shape
    xf = x.reshape(B, C, H * W).astype(jnp.float32)
    avg_pool = jnp.mean(xf, axis=2)                      # (B, C)
    max_pool = jnp.max(xf, axis=2)                       # (B, C)

    def mlp(p):
        h = jnp.maximum(p @ w1 + b1, 0.0)
        return h @ w2 + b2

    att = mlp(avg_pool) + mlp(max_pool)                  # (B, C)
    scale = jax.nn.sigmoid(att)[:, :, None, None]
    return (x.astype(jnp.float32) * scale).astype(x.dtype)


if __name__ == "__main__":
    # gate_channels=32, reduction_ratio=16 -> hidden=2
    B, C, H, W = 2, 32, 16, 16
    R = 16
    Ch = C // R

    key = jax.random.PRNGKey(0)
    kx, k1, k2, k3, k4 = jax.random.split(key, 5)

    x = jax.random.normal(kx, (B, C, H, W), dtype=jnp.float32)

    # Deterministic parameter init (Linear weights stored as (in, out)).
    w1 = jax.random.normal(k1, (C, Ch), dtype=jnp.float32) * (1.0 / jnp.sqrt(C))
    b1 = jax.random.normal(k2, (Ch,), dtype=jnp.float32) * 0.01
    w2 = jax.random.normal(k3, (Ch, C), dtype=jnp.float32) * (1.0 / jnp.sqrt(Ch))
    b2 = jax.random.normal(k4, (C,), dtype=jnp.float32) * 0.01

    out = jax.block_until_ready(channel_gate(x, w1, b1, w2, b2))
    ref = channel_gate_ref(x, w1, b1, w2, b2)

    assert out.shape == x.shape and out.dtype == x.dtype
    err = jnp.max(jnp.abs(out.astype(jnp.float32) - ref.astype(jnp.float32)))
    # approx reciprocal (EUP) sigmoid -> allow small absolute error
    assert err < 1e-2, f"max abs err {err}"
    print("KERNEL_OK")
</pallas_src>

<mosaic_0001>
module attributes {stable_mosaic.version = 11 : i64} {
  func.func @channel_gate_kernel(%arg0: i32, %arg1: memref<1x32x256xf32, #tpu.memory_space<vmem>>, %arg2: memref<2x32xf32, #tpu.memory_space<vmem>>, %arg3: memref<2x1xf32, #tpu.memory_space<vmem>>, %arg4: memref<32x2xf32, #tpu.memory_space<vmem>>, %arg5: memref<32x1xf32, #tpu.memory_space<vmem>>, %arg6: memref<1x32x256xf32, #tpu.memory_space<vmem>>) attributes {dimension_semantics = [#tpu.dimension_semantics<parallel>], iteration_bounds = array<i64: 2>, scalar_prefetch = 0 : i64, scratch_operands = 0 : i64, tpu.core_type = #tpu.core_type<tc>, window_params = [{transform_indices = @transform_0, window_bounds = array<i64: 1, 32, 256>}, {pipeline_mode = #tpu.pipeline_mode<synchronous>, transform_indices = @transform_1, window_bounds = array<i64: 2, 32>}, {pipeline_mode = #tpu.pipeline_mode<synchronous>, transform_indices = @transform_2, window_bounds = array<i64: 2, 1>}, {pipeline_mode = #tpu.pipeline_mode<synchronous>, transform_indices = @transform_3, window_bounds = array<i64: 32, 2>}, {pipeline_mode = #tpu.pipeline_mode<synchronous>, transform_indices = @transform_4, window_bounds = array<i64: 32, 1>}, {transform_indices = @transform_5, window_bounds = array<i64: 1, 32, 256>}]} {
    %c0 = arith.constant 0 : index
    %c0_0 = arith.constant 0 : index
    %c0_1 = arith.constant 0 : index
    %0 = vector.load %arg1[%c0, %c0_0, %c0_1] : memref<1x32x256xf32, #tpu.memory_space<vmem>>, vector<1x32x256xf32>
    %cst = arith.constant dense<0.000000e+00> : vector<1x32xf32>
    %1 = vector.multi_reduction <add>, %0, %cst [2] : vector<1x32x256xf32> to vector<1x32xf32>
    %2 = vector.shape_cast %1 : vector<1x32xf32> to vector<1x32x1xf32>
    %cst_2 = arith.constant 3.906250e-03 : f32
    %3 = vector.broadcast %cst_2 : f32 to vector<1x32x1xf32>
    %4 = arith.mulf %2, %3 : vector<1x32x1xf32>
    %cst_3 = arith.constant dense<0xFF800000> : vector<1x32xf32>
    %5 = vector.multi_reduction <maximumf>, %0, %cst_3 [2] : vector<1x32x256xf32> to vector<1x32xf32>
    %6 = vector.shape_cast %5 : vector<1x32xf32> to vector<1x32x1xf32>
    %7 = tpu.concatenate %4, %6 in 2 : vector<1x32x1xf32>, vector<1x32x1xf32> -> vector<1x32x2xf32>
    %c0_4 = arith.constant 0 : index
    %c0_5 = arith.constant 0 : index
    %8 = vector.load %arg2[%c0_4, %c0_5] : memref<2x32xf32, #tpu.memory_space<vmem>>, vector<2x32xf32>
    %c0_6 = arith.constant 0 : index
    %c0_7 = arith.constant 0 : index
    %9 = vector.load %arg3[%c0_6, %c0_7] : memref<2x1xf32, #tpu.memory_space<vmem>>, vector<2x1xf32>
    %c0_8 = arith.constant 0 : index
    %c0_9 = arith.constant 0 : index
    %10 = vector.load %arg4[%c0_8, %c0_9] : memref<32x2xf32, #tpu.memory_space<vmem>>, vector<32x2xf32>
    %c0_10 = arith.constant 0 : index
    %c0_11 = arith.constant 0 : index
    %11 = vector.load %arg5[%c0_10, %c0_11] : memref<32x1xf32, #tpu.memory_space<vmem>>, vector<32x1xf32>
    %12 = vector.shape_cast %8 : vector<2x32xf32> to vector<1x2x32xf32>
    %cst_12 = arith.constant dense<0.000000e+00> : vector<1x2x2xf32>
    %13 = tpu.matmul %12, %7, %cst_12 {dimension_numbers = #tpu.dot_dimension_numbers<[2], [1], [1], [2], [0, 0, 0, 1, 1, 2], [0], [0]>} : vector<1x2x32xf32>, vector<1x32x2xf32>, vector<1x2x2xf32> -> vector<1x2x2xf32>
    %14 = vector.shape_cast %9 : vector<2x1xf32> to vector<1x2x1xf32>
    %15 = vector.broadcast %14 : vector<1x2x1xf32> to vector<1x2x2xf32>
    %16 = arith.addf %13, %15 : vector<1x2x2xf32>
    %cst_13 = arith.constant 0.000000e+00 : f32
    %17 = vector.broadcast %cst_13 : f32 to vector<1x2x2xf32>
    %18 = arith.maximumf %16, %17 : vector<1x2x2xf32>
    %19 = vector.shape_cast %10 : vector<32x2xf32> to vector<1x32x2xf32>
    %cst_14 = arith.constant dense<0.000000e+00> : vector<1x32x2xf32>
    %20 = tpu.matmul %19, %18, %cst_14 {dimension_numbers = #tpu.dot_dimension_numbers<[2], [1], [1], [2], [0, 0, 0, 1, 1, 2], [0], [0]>} : vector<1x32x2xf32>, vector<1x2x2xf32>, vector<1x32x2xf32> -> vector<1x32x2xf32>
    %21 = vector.shape_cast %11 : vector<32x1xf32> to vector<1x32x1xf32>
    %22 = vector.broadcast %21 : vector<1x32x1xf32> to vector<1x32x2xf32>
    %23 = arith.addf %20, %22 : vector<1x32x2xf32>
    %cst_15 = arith.constant dense<0.000000e+00> : vector<1x32xf32>
    %24 = vector.multi_reduction <add>, %23, %cst_15 [2] : vector<1x32x2xf32> to vector<1x32xf32>
    %25 = vector.shape_cast %24 : vector<1x32xf32> to vector<1x32x1xf32>
    %cst_16 = arith.constant 0.000000e+00 : f32
    %26 = vector.broadcast %cst_16 : f32 to vector<1x32x1xf32>
    %27 = arith.subf %26, %25 : vector<1x32x1xf32>
    %28 = math.exp %27 : vector<1x32x1xf32>
    %cst_17 = arith.constant 1.000000e+00 : f32
    %29 = vector.broadcast %cst_17 : f32 to vector<1x32x1xf32>
    %30 = arith.addf %29, %28 : vector<1x32x1xf32>
    %31 = tpu.reciprocal %30 {approx = true} : vector<1x32x1xf32> -> vector<1x32x1xf32>
    %32 = vector.broadcast %31 : vector<1x32x1xf32> to vector<1x32x256xf32>
    %33 = arith.mulf %0, %32 : vector<1x32x256xf32>
    %c0_18 = arith.constant 0 : index
    %c0_19 = arith.constant 0 : index
    %c0_20 = arith.constant 0 : index
    %34 = vector.load %arg6[%c0_18, %c0_19, %c0_20] : memref<1x32x256xf32, #tpu.memory_space<vmem>>, vector<1x32x256xf32>
    tpu.vector_store %arg6[%c0_18, %c0_19, %c0_20], %33 {strides = array<i32>} : memref<1x32x256xf32, #tpu.memory_space<vmem>>, vector<1x32x256xf32>,
    return
  }
  func.func @transform_0(%arg0: i32) -> (i32, i32, i32) {
    %c0_i32 = arith.constant 0 : i32
    %c0_i32_0 = arith.constant 0 : i32
    %c0_i32_1 = arith.constant 0 : i32
    return %arg0, %c0_i32, %c0_i32_0 : i32, i32, i32
  }
  func.func @transform_1(%arg0: i32) -> (i32, i32) {
    %c0_i32 = arith.constant 0 : i32
    %c0_i32_0 = arith.constant 0 : i32
    %c0_i32_1 = arith.constant 0 : i32
    return %c0_i32, %c0_i32_0 : i32, i32
  }
  func.func @transform_2(%arg0: i32) -> (i32, i32) {
    %c0_i32 = arith.constant 0 : i32
    %c0_i32_0 = arith.constant 0 : i32
    %c0_i32_1 = arith.constant 0 : i32
    return %c0_i32, %c0_i32_0 : i32, i32
  }
  func.func @transform_3(%arg0: i32) -> (i32, i32) {
    %c0_i32 = arith.constant 0 : i32
    %c0_i32_0 = arith.constant 0 : i32
    %c0_i32_1 = arith.constant 0 : i32
    return %c0_i32, %c0_i32_0 : i32, i32
  }
  func.func @transform_4(%arg0: i32) -> (i32, i32) {
    %c0_i32 = arith.constant 0 : i32
    %c0_i32_0 = arith.constant 0 : i32
    %c0_i32_1 = arith.constant 0 : i32
    return %c0_i32, %c0_i32_0 : i32, i32
  }
  func.func @transform_5(%arg0: i32) -> (i32, i32, i32) {
    %c0_i32 = arith.constant 0 : i32
    %c0_i32_0 = arith.constant 0 : i32
    %c0_i32_1 = arith.constant 0 : i32
    return %arg0, %c0_i32, %c0_i32_0 : i32, i32, i32
  }
}

</mosaic_0001>

<llo_original>
// kernel: channel_gate.1
$region0: #{channel_gate.1}
  #allocation0 [shape = 'u32[]', space=smem, size = 0x4, offset = 0x4, fixed_abs, tag = 'smem constant byte address 0x4 - core index']
  #allocation1 [shape = 'u32[144,128]{1,0:T(1,128)}', space=vmem, size = 0x12000, scoped, tag = 'internal scratch']
  %s0 = inlined_call_operand.vmem [shape: f32[2,32,256], index: 0, kind: input, shape index: {}]
  %s1 = inlined_call_operand.vmem [shape: f32[2,32], index: 1, kind: input, shape index: {}]
  %s2 = inlined_call_operand.vmem [shape: f32[2,1], index: 2, kind: input, shape index: {}]
  %s3 = inlined_call_operand.vmem [shape: f32[32,2], index: 3, kind: input, shape index: {}]
  %s4 = inlined_call_operand.vmem [shape: f32[32,1], index: 4, kind: input, shape index: {}]
  %s5 = inlined_call_operand.vmem [shape: f32[2,32,256], index: 5, kind: output, shape index: {}]
  %s6 = sld [smem:[#allocation0]]
  $region53: #{channel_gate.1} parent=0
    _
  %s8 = ssub.s32 1, %s6
  %s9 = scalar_select 0, %s8, %s6
  loop: start=0, step=1, limit=4
  $region2: #{channel_gate.1} parent=0 // loop_pre_header
    _
  $region3: #{channel_gate.1} parent=0 // loop_header
    %s11 = sphi 0, %s15
    %p12 = scmp.ge.s32.totalorder %s11, 4
    %s21 = sphi 0, %s23
    %s24 = sphi 0, %s21
    %s25 = sphi 0, %s24
    %s41 = sphi 0, %s25
    %s45 = sphi 0, %s45
    %s47 = sphi 0, %s45
    %s48 = sphi 0, %s47
    %s62 = sphi 0, %s48
    %s66 = sphi 0, %s66
    %s68 = sphi 0, %s66
    %s69 = sphi 0, %s68
    %s83 = sphi 0, %s69
    %s87 = sphi 0, %s87
    %s89 = sphi 0, %s87
    %s90 = sphi 0, %s89
    %s104 = sphi 0, %s90
    %s108 = sphi 0, %s108
    %s110 = sphi 0, %s108
    %s111 = sphi 0, %s110
    %s125 = sphi 0, %s111
    %s131 = sphi 0, %s133
    %s134 = sphi 0, %s131
    %s135 = sphi 0, %s134
    %s151 = sphi 0, %s135
  $region4: #{channel_gate.1} parent=0 // loop_header_branch
    %14 = sbr.rel (%p12) target = $region8
  $region5: #{channel_gate.1} parent=0 // loop_body
    %s16 = ssub.s32 %s11, 1
    %s17 = ssub.s32 %s11, 2
    %s18 = sadd.s32 %s11, 1
    %s19 = ssub.s32 %s11, %s18
    %p20 = scmp.eq.s32.totalorder %s19, 0
    %s22 = sadd.s32 %s21, 1
    %s23 = scalar_select %p20, %s21, %s22
    %p26 = pneg %p20
    %p27 = scmp.eq.s32.totalorder %s11, 1
    %p28 = por %p26, %p27
    %p29 = scmp.ne.s32.totalorder %s21, %s24
    %p30 = scmp.eq.s32.totalorder %s11, 0
    %p31 = por %p29, %p30
    %p32 = scmp.ne.s32.totalorder %s21, %s24
    %p33 = scmp.eq.s32.totalorder %s16, 1
    %p34 = por %p32, %p33
    %p35 = scmp.ne.s32.totalorder %s24, %s25
    %p36 = scmp.eq.s32.totalorder %s16, 0
    %p37 = por %p35, %p36
    %p38 = scmp.ne.s32.totalorder %s24, %s25
    %p39 = scmp.eq.s32.totalorder %s17, 1
    %p40 = por %p38, %p39
    %p42 = scmp.ne.s32.totalorder %s25, %s41
    %p43 = scmp.eq.s32.totalorder %s17, 0
    %p44 = por %p42, %p43
    %s46 = sadd.s32 %s45, 1
    %p49 = scmp.eq.s32.totalorder %s11, 1
    %p50 = scmp.ne.s32.totalorder %s45, %s47
    %p51 = scmp.eq.s32.totalorder %s11, 0
    %p52 = por %p50, %p51
    %p53 = scmp.ne.s32.totalorder %s45, %s47
    %p54 = scmp.eq.s32.totalorder %s16, 1
    %p55 = por %p53, %p54
    %p56 = scmp.ne.s32.totalorder %s47, %s48
    %p57 = scmp.eq.s32.totalorder %s16, 0
    %p58 = por %p56, %p57
    %p59 = scmp.ne.s32.totalorder %s47, %s48
    %p60 = scmp.eq.s32.totalorder %s17, 1
    %p61 = por %p59, %p60
    %p63 = scmp.ne.s32.totalorder %s48, %s62
    %p64 = scmp.eq.s32.totalorder %s17, 0
    %p65 = por %p63, %p64
    %s67 = sadd.s32 %s66, 1
    %p70 = scmp.eq.s32.totalorder %s11, 1
    %p71 = scmp.ne.s32.totalorder %s66, %s68
    %p72 = scmp.eq.s32.totalorder %s11, 0
    %p73 = por %p71, %p72
    %p74 = scmp.ne.s32.totalorder %s66, %s68
    %p75 = scmp.eq.s32.totalorder %s16, 1
    %p76 = por %p74, %p75
    %p77 = scmp.ne.s32.totalorder %s68, %s69
    %p78 = scmp.eq.s32.totalorder %s16, 0
    %p79 = por %p77, %p78
    %p80 = scmp.ne.s32.totalorder %s68, %s69
    %p81 = scmp.eq.s32.totalorder %s17, 1
    %p82 = por %p80, %p81
    %p84 = scmp.ne.s32.totalorder %s69, %s83
    %p85 = scmp.eq.s32.totalorder %s17, 0
    %p86 = por %p84, %p85
    %s88 = sadd.s32 %s87, 1
    %p91 = scmp.eq.s32.totalorder %s11, 1
    %p92 = scmp.ne.s32.totalorder %s87, %s89
    %p93 = scmp.eq.s32.totalorder %s11, 0
    %p94 = por %p92, %p93
    %p95 = scmp.ne.s32.totalorder %s87, %s89
    %p96 = scmp.eq.s32.totalorder %s16, 1
    %p97 = por %p95, %p96
    %p98 = scmp.ne.s32.totalorder %s89, %s90
    %p99 = scmp.eq.s32.totalorder %s16, 0
    %p100 = por %p98, %p99
    %p101 = scmp.ne.s32.totalorder %s89, %s90
    %p102 = scmp.eq.s32.totalorder %s17, 1
    %p103 = por %p101, %p102
    %p105 = scmp.ne.s32.totalorder %s90, %s104
    %p106 = scmp.eq.s32.totalorder %s17, 0
    %p107 = por %p105, %p106
    %s109 = sadd.s32 %s108, 1
    %p112 = scmp.eq.s32.totalorder %s11, 1
    %p113 = scmp.ne.s32.totalorder %s108, %s110
    %p114 = scmp.eq.s32.totalorder %s11, 0
    %p115 = por %p113, %p114
    %p116 = scmp.ne.s32.totalorder %s108, %s110
    %p117 = scmp.eq.s32.totalorder %s16, 1
    %p118 = por %p116, %p117
    %p119 = scmp.ne.s32.totalorder %s110, %s111
    %p120 = scmp.eq.s32.totalorder %s16, 0
    %p121 = por %p119, %p120
    %p122 = scmp.ne.s32.totalorder %s110, %s111
    %p123 = scmp.eq.s32.totalorder %s17, 1
    %p124 = por %p122, %p123
    %p126 = scmp.ne.s32.totalorder %s111, %s125
    %p127 = scmp.eq.s32.totalorder %s17, 0
    %p128 = por %p126, %p127
    %s129 = ssub.s32 %s11, %s18
    %p130 = scmp.eq.s32.totalorder %s129, 0
    %s132 = sadd.s32 %s131, 1
    %s133 = scalar_select %p130, %s131, %s132
    %p136 = pneg %p130
    %p137 = scmp.eq.s32.totalorder %s11, 1
    %p138 = por %p136, %p137
    %p139 = scmp.ne.s32.totalorder %s131, %s134
    %p140 = scmp.eq.s32.totalorder %s11, 0
    %p141 = por %p139, %p140
    %p142 = scmp.ne.s32.totalorder %s131, %s134
    %p143 = scmp.eq.s32.totalorder %s16, 1
    %p144 = por %p142, %p143
    %p145 = scmp.ne.s32.totalorder %s134, %s135
    %p146 = scmp.eq.s32.totalorder %s16, 0
    %p147 = por %p145, %p146
    %p148 = scmp.ne.s32.totalorder %s134, %s135
    %p149 = scmp.eq.s32.totalorder %s17, 1
    %p150 = por %p148, %p149
    %p152 = scmp.ne.s32.totalorder %s135, %s151
    %p153 = scmp.eq.s32.totalorder %s17, 0
    %p154 = por %p152, %p153
    %p155 = scmp.le.s32.totalorder 1, %s11
    %p156 = scmp.lt.s32.totalorder %s11, 3
    %p157 = pnand %p155, %p156
    %p158 = pneg %p157
    // Predicated region
    $region9: #{channel_gate.1} parent=5 // pred_check
      _
    $region10: #{channel_gate.1} parent=5 // pred_check_branch
      %160 = sbr.rel (%p157) target = $region12
    $region11: #{channel_gate.1} parent=5 // pred_region
      %s161 = ssub.s32 %s11, 1
      // Predicated region
      $region13: #{channel_gate.1} parent=11 // pred_check
        %p162 = pneg %p58
      $region14: #{channel_gate.1} parent=11 // pred_check_branch
        %164 = sbr.rel (%p162) target = $region16
      $region15: #{channel_gate.1} parent=11 // pred_region
        _
      $region16: #{channel_gate.1} parent=11 // pred_fallthru
        _
      // Predicated region
      $region17: #{channel_gate.1} parent=11 // pred_check
        %p165 = pneg %p79
      $region18: #{channel_gate.1} parent=11 // pred_check_branch
        %167 = sbr.rel (%p165) target = $region20
      $region19: #{channel_gate.1} parent=11 // pred_region
        _
      $region20: #{channel_gate.1} parent=11 // pred_fallthru
        _
      // Predicated region
      $region21: #{channel_gate.1} parent=11 // pred_check
        %p168 = pneg %p100
      $region22: #{channel_gate.1} parent=11 // pred_check_branch
        %170 = sbr.rel (%p168) target = $region24
      $region23: #{channel_gate.1} parent=11 // pred_region
        _
      $region24: #{channel_gate.1} parent=11 // pred_fallthru
        _
      // Predicated region
      $region25: #{channel_gate.1} parent=11 // pred_check
        %p171 = pneg %p121
      $region26: #{channel_gate.1} parent=11 // pred_check_branch
        %173 = sbr.rel (%p171) target = $region28
      $region27: #{channel_gate.1} parent=11 // pred_region
        _
      $region28: #{channel_gate.1} parent=11 // pred_fallthru
        _
    $region12: #{channel_gate.1} parent=5 // pred_fallthru
      _
    %p174 = scmp.lt.s32.totalorder %s11, 2
    // Predicated region
    $region29: #{channel_gate.1} parent=5 // pred_check
      %p175 = pneg %p174
    $region30: #{channel_gate.1} parent=5 // pred_check_branch
      %177 = sbr.rel (%p175) target = $region32
    $region31: #{channel_gate.1} parent=5 // pred_region
      // Predicated region
      $region33: #{channel_gate.1} parent=31 // pred_check
        %p178 = pneg %p31
      $region34: #{channel_gate.1} parent=31 // pred_check_branch
        %180 = sbr.rel (%p178) target = $region36
      $region35: #{channel_gate.1} parent=31 // pred_region
        %p181 = scmp.lt.s32.totalorder %s11, 1
        %s182 = scalar_select %p181, %s11, 1
        %s183 = smul.addr %s182, 8
        %s184 = smul.addr %s183, 8
        %s185 = scalar_lea.vmem %s0, %s184
      $region36: #{channel_gate.1} parent=31 // pred_fallthru
        _
    $region32: #{channel_gate.1} parent=5 // pred_fallthru
      _
    %p186 = scmp.le.s32.totalorder 1, %s11
    %p187 = scmp.lt.s32.totalorder %s11, 3
    %p188 = pnand %p186, %p187
    %p189 = pneg %p188
    // Predicated region
    $region37: #{channel_gate.1} parent=5 // pred_check
      _
    $region38: #{channel_gate.1} parent=5 // pred_check_branch
      %191 = sbr.rel (%p188) target = $region40
    $region39: #{channel_gate.1} parent=5 // pred_region
      %s192 = ssub.s32 %s11, 1
      %p193 = scmp.lt.s32.totalorder %s16, 1
      %s194 = scalar_select %p193, %s16, 1
      %s195 = smul.addr %s194, 8
      %s196 = smul.addr %s195, 8
      %s197 = scalar_lea.vmem %s0, %s196
      %p198 = pneg %p37
      %p199 = pneg %p34
      %p200 = pneg %p58
      %p201 = pneg %p55
      %p202 = pneg %p79
      %p203 = pneg %p76
      %p204 = pneg %p100
      %p205 = pneg %p97
      %p206 = pneg %p121
      %p207 = pneg %p118
      %p208 = pneg %p147
      %p209 = pneg %p144
      %p210 = scmp.lt.s32.totalorder %s16, 1
      %s211 = scalar_select %p210, %s16, 1
      %s212 = smul.addr %s211, 8
      %s213 = smul.addr %s212, 8
      %s214 = scalar_lea.vmem %s5, %s213
      %p215 = scmp.lt.s32.totalorder %s16, 1
      %s216 = scalar_select %p215, %s16, 1
      %s217 = smul.addr %s216, 8
      %s218 = smul.addr %s217, 8
      %s219 = scalar_lea.vmem %s0, %s218
      %p220 = scmp.lt.s32.totalorder %s16, 1
      %s221 = scalar_select %p220, %s16, 1
      %s222 = smul.addr %s221, 8
      %s223 = smul.addr %s222, 8
      %s224 = scalar_lea.vmem %s5, %s223
      %v225 = vld [vmem:[%s219] sm:$0xff]
      %v226 = vld [vmem:[%s219 + $0x8] sm:$0xff]
      %v227 = vld [vmem:[%s219 + $0x10] sm:$0xff]
      %v228 = vld [vmem:[%s219 + $0x18] sm:$0xff]
      %v229 = vld [vmem:[%s219 + $0x20] sm:$0xff]
      %v230 = vld [vmem:[%s219 + $0x28] sm:$0xff]
      %v231 = vld [vmem:[%s219 + $0x30] sm:$0xff]
      %v232 = vld [vmem:[%s219 + $0x38] sm:$0xff]
      %v233 = vadd.f32 %v225, %v226
      %234 = vadd.xlane.f32.xlu0 %v233
      %v235 = vpop.xlane.xlu0 %234
      %v236 = vadd.f32 %v227, %v228
      %237 = vadd.xlane.f32.xlu0 %v236
      %v238 = vpop.xlane.xlu0 %237
      %v239 = vadd.f32 %v229, %v230
      %240 = vadd.xlane.f32.xlu0 %v239
      %v241 = vpop.xlane.xlu0 %240
      %v242 = vadd.f32 %v231, %v232
      %243 = vadd.xlane.f32.xlu0 %v242
      %v244 = vpop.xlane.xlu0 %243
      %v245 = vmul.f32 %v235, 0.00390625
      %v246 = vmul.f32 %v238, 0.00390625
      %v247 = vmul.f32 %v241, 0.00390625
      %v248 = vmul.f32 %v244, 0.00390625
      %v249 = vmax.f32 %v225, %v226
      %250 = vmax.xlane.f32.xlu0 %v249
      %v251 = vpop.xlane.xlu0 %250
      %v252 = vmax.f32 %v227, %v228
      %253 = vmax.xlane.f32.xlu0 %v252
      %v254 = vpop.xlane.xlu0 %253
      %v255 = vmax.f32 %v229, %v230
      %256 = vmax.xlane.f32.xlu0 %v255
      %v257 = vpop.xlane.xlu0 %256
      %v258 = vmax.f32 %v231, %v232
      %259 = vmax.xlane.f32.xlu0 %v258
      %v260 = vpop.xlane.xlu0 %259
      %vm261 = vcmask 7168
      %v262 = vsel %vm261, %v245, %v251
      %v263 = vsel %vm261, %v246, %v254
      %v264 = vsel %vm261, %v247, %v257
      %v265 = vsel %vm261, %v248, %v260
      %v266 = vld [vmem:[%s1] sm:$0x3]
      %v267 = vld [vmem:[%s2] sm:$0x3]
      %v268 = vld [vmem:[%s3] sm:$0xff]
      %v269 = vld [vmem:[%s3 + $0x8] sm:$0xff]
      %v270 = vld [vmem:[%s3 + $0x10] sm:$0xff]
      %v271 = vld [vmem:[%s3 + $0x18] sm:$0xff]
      %v272 = vld [vmem:[%s4] sm:$0xff]
      %v273 = vld [vmem:[%s4 + $0x8] sm:$0xff]
      %v274 = vld [vmem:[%s4 + $0x10] sm:$0xff]
      %v275 = vld [vmem:[%s4 + $0x18] sm:$0xff]
      %277 = vset.pattern.permute.xlu0 0
      %278 = vperm.xlu0 %277, %v267
      %v279 = vpop.permute.xlu0 %278
      %vm281 = vcmask 261120
      %v283 = vsel %vm281, %v266, 0
      %285 = vmatprep.subr.mxu0 0.0
      %286 = vmatpush1.msra.mxu0 %v262
      %287 = vmatprep.subr.mxu0 0.0
      %288 = vmatpush1.msra.mxu0 %v263
      %289 = vmatprep.subr.mxu0 0.0
      %290 = vmatpush1.msra.mxu0 %v264
      %291 = vmatprep.subr.mxu0 0.0
      %292 = vmatpush1.msra.mxu0 %v265
      %293 = vmatprep.subr.mxu0 0.0
      %294 = vmatpush1.msra.mxu0 0.0
      %295 = vmatprep.subr.mxu0 0.0
      %296 = vmatpush1.msra.mxu0 0.0
      %297 = vmatprep.subr.mxu0 0.0
      %298 = vmatpush1.msra.mxu0 0.0
      %299 = vmatprep.subr.mxu0 0.0
      %300 = vmatpush1.msra.mxu0 0.0
      %301 = vmatprep.subr.mxu0 0.0
      %302 = vmatpush1.msra.mxu0 0.0
      %303 = vmatprep.subr.mxu0 0.0
      %304 = vmatpush1.msra.mxu0 0.0
      %305 = vmatprep.subr.mxu0 0.0
      %306 = vmatpush1.msra.mxu0 0.0
      %307 = vmatprep.subr.mxu0 0.0
      %308 = vmatpush1.msra.mxu0 0.0
      %309 = vmatprep.subr.mxu0 0.0
      %310 = vmatpush1.msra.mxu0 0.0
      %311 = vmatprep.subr.mxu0 0.0
      %312 = vmatpush1.msra.mxu0 0.0
      %313 = vmatprep.subr.mxu0 0.0
      %314 = vmatpush1.msra.mxu0 0.0
      %315 = vmatprep.subr.mxu0 0.0
      %316 = vmatpush1.msra.mxu0 0.0
      %317 = vmatprep.subr.mxu0 0.0
      %318 = vmatpush1.msra.mxu0 0.0
      %319 = vmatprep.subr.mxu0 0.0
      %320 = vmatpush1.msra.mxu0 0.0
      %321 = vmatprep.subr.mxu0 0.0
      %322 = vmatpush1.msra.mxu0 0.0
      %323 = vmatprep.subr.mxu0 0.0
      %324 = vmatpush1.msra.mxu0 0.0
      %325 = vmatprep.subr.mxu0 0.0
      %326 = vmatpush1.msra.mxu0 0.0
      %327 = vmatprep.subr.mxu0 0.0
      %328 = vmatpush1.msra.mxu0 0.0
      %329 = vmatprep.subr.mxu0 0.0
      %330 = vmatpush1.msra.mxu0 0.0
      %331 = vmatprep.subr.mxu0 0.0
      %332 = vmatpush1.msra.mxu0 0.0
      %333 = vmatprep.subr.mxu0 0.0
      %334 = vmatpush1.msra.mxu0 0.0
      %335 = vmatprep.subr.mxu0 0.0
      %336 = vmatpush1.msra.mxu0 0.0
      %337 = vmatprep.subr.mxu0 0.0
      %338 = vmatpush1.msra.mxu0 0.0
      %339 = vmatprep.subr.mxu0 0.0
      %340 = vmatpush1.msra.mxu0 0.0
      %341 = vmatprep.subr.mxu0 0.0
      %342 = vmatpush1.msra.mxu0 0.0
      %343 = vmatprep.subr.mxu0 0.0
      %344 = vmatpush1.msra.mxu0 0.0
      %345 = vmatprep.subr.mxu0 0.0
      %346 = vmatpush1.msra.mxu0 0.0
      %347 = vmatprep.subr.mxu0 0.0
      %348 = vmatpush1.msra.mxu0 0.0
      %349 = vmatprep.mubr.f32.mxu0 0.0
      %350 = vmatmul.mubr.f32.gmra.mrb[0].mxu0 %v283
      %v351 = vpop.f32.mrb[0].mxu0
      %v352 = vadd.f32 %v279, %v351
      %v353 = vpop.f32.mrb[0].mxu0
      %354 = vdwg.mxu0
      %v355 = vmax.f32 %v352, 0.0
      %357 = vset.pattern.permute.xlu0 0
      %358 = vperm.xlu0 %357, %v272
      %v359 = vpop.permute.xlu0 %358
      %362 = vset.pattern.permute.xlu0 0
      %363 = vperm.xlu0 %362, %v273
      %v364 = vpop.permute.xlu0 %363
      %367 = vset.pattern.permute.xlu0 0
      %368 = vperm.xlu0 %367, %v274
      %v369 = vpop.permute.xlu0 %368
      %372 = vset.pattern.permute.xlu0 0
      %373 = vperm.xlu0 %372, %v275
      %v374 = vpop.permute.xlu0 %373
      %vm376 = vcmask 15360
      %v378 = vsel %vm376, %v268, 0
      %v381 = vsel %vm376, %v269, 0
      %v384 = vsel %vm376, %v270, 0
      %v387 = vsel %vm376, %v271, 0
      %vm389 = vcmask 1041408
      %v391 = vsel %vm389, %v355, 0
      %393 = vmatprep.subr.mxu0 0.0
      %394 = vmatpush1.msra.mxu0 %v391
      %395 = vmatprep.subr.mxu0 0.0
      %396 = vmatpush1.msra.mxu0 0.0
      %397 = vmatprep.subr.mxu0 0.0
      %398 = vmatpush1.msra.mxu0 0.0
      %399 = vmatprep.subr.mxu0 0.0
      %400 = vmatpush1.msra.mxu0 0.0
      %401 = vmatprep.subr.mxu0 0.0
      %402 = vmatpush1.msra.mxu0 0.0
      %403 = vmatprep.subr.mxu0 0.0
      %404 = vmatpush1.msra.mxu0 0.0
      %405 = vmatprep.subr.mxu0 0.0
      %406 = vmatpush1.msra.mxu0 0.0
      %407 = vmatprep.subr.mxu0 0.0
      %408 = vmatpush1.msra.mxu0 0.0
      %409 = vmatprep.subr.mxu0 0.0
      %410 = vmatpush1.msra.mxu0 0.0
      %411 = vmatprep.subr.mxu0 0.0
      %412 = vmatpush1.msra.mxu0 0.0
      %413 = vmatprep.subr.mxu0 0.0
      %414 = vmatpush1.msra.mxu0 0.0
      %415 = vmatprep.subr.mxu0 0.0
      %416 = vmatpush1.msra.mxu0 0.0
      %417 = vmatprep.subr.mxu0 0.0
      %418 = vmatpush1.msra.mxu0 0.0
      %419 = vmatprep.subr.mxu0 0.0
      %420 = vmatpush1.msra.mxu0 0.0
      %421 = vmatprep.subr.mxu0 0.0
      %422 = vmatpush1.msra.mxu0 0.0
      %423 = vmatprep.subr.mxu0 0.0
      %424 = vmatpush1.msra.mxu0 0.0
      %425 = vmatprep.subr.mxu0 0.0
      %426 = vmatpush1.msra.mxu0 0.0
      %427 = vmatprep.subr.mxu0 0.0
      %428 = vmatpush1.msra.mxu0 0.0
      %429 = vmatprep.subr.mxu0 0.0
      %430 = vmatpush1.msra.mxu0 0.0
      %431 = vmatprep.subr.mxu0 0.0
      %432 = vmatpush1.msra.mxu0 0.0
      %433 = vmatprep.subr.mxu0 0.0
      %434 = vmatpush1.msra.mxu0 0.0
      %435 = vmatprep.subr.mxu0 0.0
      %436 = vmatpush1.msra.mxu0 0.0
      %437 = vmatprep.subr.mxu0 0.0
      %438 = vmatpush1.msra.mxu0 0.0
      %439 = vmatprep.subr.mxu0 0.0
      %440 = vmatpush1.msra.mxu0 0.0
      %441 = vmatprep.subr.mxu0 0.0
      %442 = vmatpush1.msra.mxu0 0.0
      %443 = vmatprep.subr.mxu0 0.0
      %444 = vmatpush1.msra.mxu0 0.0
      %445 = vmatprep.subr.mxu0 0.0
      %446 = vmatpush1.msra.mxu0 0.0
      %447 = vmatprep.subr.mxu0 0.0
      %448 = vmatpush1.msra.mxu0 0.0
      %449 = vmatprep.subr.mxu0 0.0
      %450 = vmatpush1.msra.mxu0 0.0
      %451 = vmatprep.subr.mxu0 0.0
      %452 = vmatpush1.msra.mxu0 0.0
      %453 = vmatprep.subr.mxu0 0.0
      %454 = vmatpush1.msra.mxu0 0.0
      %455 = vmatprep.subr.mxu0 0.0
      %456 = vmatpush1.msra.mxu0 0.0
      %457 = vmatprep.mubr.f32.mxu0 0.0
      %458 = vmatmul.mubr.f32.gmra.mrb[0].mxu0 %v378
      %v459 = vpop.f32.mrb[0].mxu0
      %v460 = vadd.f32 %v359, %v459
      %v461 = vpop.f32.mrb[0].mxu0
      %462 = vmatprep.mubr.f32.mxu0 0.0
      %463 = vmatmul.mubr.f32.gmra.mrb[0].mxu0 %v381
      %v464 = vpop.f32.mrb[0].mxu0
      %v465 = vadd.f32 %v364, %v464
      %v466 = vpop.f32.mrb[0].mxu0
      %467 = vmatprep.mubr.f32.mxu0 0.0
      %468 = vmatmul.mubr.f32.gmra.mrb[0].mxu0 %v384
      %v469 = vpop.f32.mrb[0].mxu0
      %v470 = vadd.f32 %v369, %v469
      %v471 = vpop.f32.mrb[0].mxu0
      %472 = vmatprep.mubr.f32.mxu0 0.0
      %473 = vmatmul.mubr.f32.gmra.mrb[0].mxu0 %v387
      %v474 = vpop.f32.mrb[0].mxu0
      %v475 = vadd.f32 %v374, %v474
      %v476 = vpop.f32.mrb[0].mxu0
      %477 = vdwg.mxu0
      %v478 = vsel %vm376, %v460, 0.0
      %479 = vadd.xlane.f32.xlu0 %v478
      %v480 = vpop.xlane.xlu0 %479
      %v481 = vsel %vm376, %v465, 0.0
      %482 = vadd.xlane.f32.xlu0 %v481
      %v483 = vpop.xlane.xlu0 %482
      %v484 = vsel %vm376, %v470, 0.0
      %485 = vadd.xlane.f32.xlu0 %v484
      %v486 = vpop.xlane.xlu0 %485
      %v487 = vsel %vm376, %v475, 0.0
      %488 = vadd.xlane.f32.xlu0 %v487
      %v489 = vpop.xlane.xlu0 %488
      %v490 = vsub.f32 0.0, %v480
      %v491 = vsub.f32 0.0, %v483
      %v492 = vsub.f32 0.0, %v486
      %v493 = vsub.f32 0.0, %v489
      %v494 = vmul.f32 %v490, 1.442695
      %v495 = vpow.pop %v494
      %v496 = vmul.f32 %v491, 1.442695
      %v497 = vpow.pop %v496
      %v498 = vmul.f32 %v492, 1.442695
      %v499 = vpow.pop %v498
      %v500 = vmul.f32 %v493, 1.442695
      %v501 = vpow.pop %v500
      %v502 = vadd.f32 %v495, 1.0
      %v503 = vadd.f32 %v497, 1.0
      %v504 = vadd.f32 %v499, 1.0
      %v505 = vadd.f32 %v501, 1.0
      %v506 = vrcp.pop %v502
      %v507 = vrcp.pop %v503
      %v508 = vrcp.pop %v504
      %v509 = vrcp.pop %v505
      %v510 = vmul.f32 %v225, %v506
      %v511 = vmul.f32 %v226, %v506
      %v512 = vmul.f32 %v227, %v507
      %v513 = vmul.f32 %v228, %v507
      %v514 = vmul.f32 %v229, %v508
      %v515 = vmul.f32 %v230, %v508
      %v516 = vmul.f32 %v231, %v509
      %v517 = vmul.f32 %v232, %v509
      %518 = vst [vmem:[%s224] sm:$0xff] %v510
      %519 = vst [vmem:[%s224 + $0x8] sm:$0xff] %v511
      %520 = vst [vmem:[%s224 + $0x10] sm:$0xff] %v512
      %521 = vst [vmem:[%s224 + $0x18] sm:$0xff] %v513
      %522 = vst [vmem:[%s224 + $0x20] sm:$0xff] %v514
      %523 = vst [vmem:[%s224 + $0x28] sm:$0xff] %v515
      %524 = vst [vmem:[%s224 + $0x30] sm:$0xff] %v516
      %525 = vst [vmem:[%s224 + $0x38] sm:$0xff] %v517
      %p526 = scmp.lt.s32.totalorder %s16, 1
      %s527 = scalar_select %p526, %s16, 1
      %s528 = smul.addr %s527, 8
      %s529 = smul.addr %s528, 8
      %s530 = scalar_lea.vmem %s5, %s529
      // Predicated region
      $region41: #{channel_gate.1} parent=39 // pred_check
        %p531 = pneg %p144
      $region42: #{channel_gate.1} parent=39 // pred_check_branch
        %533 = sbr.rel (%p531) target = $region44
      $region43: #{channel_gate.1} parent=39 // pred_region
        _
      $region44: #{channel_gate.1} parent=39 // pred_fallthru
        _
    $region40: #{channel_gate.1} parent=5 // pred_fallthru
      _
    %p534 = scmp.le.s32.totalorder 2, %s11
    // Predicated region
    $region45: #{channel_gate.1} parent=5 // pred_check
      %p535 = pneg %p534
    $region46: #{channel_gate.1} parent=5 // pred_check_branch
      %537 = sbr.rel (%p535) target = $region48
    $region47: #{channel_gate.1} parent=5 // pred_region
      %s538 = ssub.s32 %s11, 2
      // Predicated region
      $region49: #{channel_gate.1} parent=47 // pred_check
        %p539 = pneg %p150
      $region50: #{channel_gate.1} parent=47 // pred_check_branch
        %541 = sbr.rel (%p539) target = $region52
      $region51: #{channel_gate.1} parent=47 // pred_region
        %p542 = scmp.lt.s32.totalorder %s17, 1
        %s543 = scalar_select %p542, %s17, 1
        %s544 = smul.addr %s543, 8
        %s545 = smul.addr %s544, 8
        %s546 = scalar_lea.vmem %s5, %s545
      $region52: #{channel_gate.1} parent=47 // pred_fallthru
        _
    $region48: #{channel_gate.1} parent=5 // pred_fallthru
      _
  $region6: #{channel_gate.1} parent=0 // loop_footer
    %s15 = sadd.s32 1, %s11
  $region7: #{channel_gate.1} parent=0 // loop_footer_branch
    %10 = sbr.rel target = $region3
  $region8: #{channel_gate.1} parent=0 // loop_exit
    _

</llo_original>
